<compile_context>
chip_gen: v6e
topology: v6e:2x2x1
jax: 0.10.0
libtpu: 0.0.40
codegen_flags: <defaults>
</compile_context>

<pallas_src>
import functools

import jax
import jax.numpy as jnp
from jax.experimental import pallas as pl
from jax.experimental.pallas import tpu as pltpu

NEG_SLOPE = 0.01  # F.leaky_relu default negative slope


def _leaky_relu(y):
    return jnp.where(y > 0, y, NEG_SLOPE * y)


# ---------------------------------------------------------------------------
# Fused forward kernel — one sample's (C, H*W) slab per grid step
# ---------------------------------------------------------------------------
def _fused_forward_kernel(
    x_ref, pool_ref,
    twT_ref, p0wT_ref, p1wT_ref, acwT_ref, memwT_ref, b_ref,
    ac_ref, memp_ref, memt_ref,
    *, bias_slices,
):
    (tb_s, p0b_s, p1b_s, acb_s, memb_s) = bias_slices

    def bias(sl):
        start, size = sl
        return b_ref[start:start + size, :]          # (c, 1) f32, lane-broadcast

    x = x_ref[...].astype(jnp.bfloat16)              # (C_in, cols) bf16 for MXU

    # --- theoretical reasoning (1 layer): 1x1 conv = matmul + bias + leaky ---
    theo = jnp.dot(twT_ref[...], x, preferred_element_type=jnp.float32) + bias(tb_s)
    theo = _leaky_relu(theo)                         # (c_mem, cols) f32

    # --- "report" -> practical reasoning (2 layers) ---
    prac = jnp.dot(p0wT_ref[...], theo.astype(jnp.bfloat16),
                   preferred_element_type=jnp.float32) + bias(p0b_s)
    prac = _leaky_relu(prac)                         # (num_neurons, cols)
    prac = jnp.dot(p1wT_ref[...], prac.astype(jnp.bfloat16),
                   preferred_element_type=jnp.float32) + bias(p1b_s)
    prac = _leaky_relu(prac)
    prac_bf = prac.astype(jnp.bfloat16)

    # --- actor/critic + memory heads: two tiny-M dots on the same operand ---
    ac = jnp.dot(acwT_ref[...], prac_bf,
                 preferred_element_type=jnp.float32) + bias(acb_s)
    ac = _leaky_relu(ac)                             # (2*noc, cols)
    memp = jnp.dot(memwT_ref[...], prac_bf,
                   preferred_element_type=jnp.float32) + bias(memb_s)
    memp = jnp.tanh(_leaky_relu(memp))               # (c_mem, cols)   EUP
    memt = jnp.tanh(theo)                            # (c_mem, cols)   EUP

    # --- fused mean over eliminated W dim: K = cols MXU right-multiply ---
    ac_ref[...] = jnp.dot(ac.astype(jnp.bfloat16), pool_ref[...],
                          preferred_element_type=jnp.float32).astype(ac_ref.dtype)
    memp_ref[...] = memp.astype(memp_ref.dtype)
    memt_ref[...] = memt.astype(memt_ref.dtype)


# ---------------------------------------------------------------------------
# Parameters (deterministic synthetic init, channels-major bf16 weights)
# ---------------------------------------------------------------------------
def init_params(key, c_in, c_mem, num_neurons, noc):
    def lin(k, fan_in, fan_out):
        w = jax.random.normal(k, (fan_out, fan_in), jnp.float32) * jnp.sqrt(2.0 / fan_in)
        return w.astype(jnp.bfloat16), jnp.zeros((fan_out,), jnp.float32)

    ks = jax.random.split(key, 5)
    p = {}
    p["theo_w"], p["theo_b"] = lin(ks[0], c_in, c_mem)            # theoretical layer
    p["prac_w0"], p["prac_b0"] = lin(ks[1], c_mem, num_neurons)   # practical layer 0
    p["prac_w1"], p["prac_b1"] = lin(ks[2], num_neurons, num_neurons)
    p["ac_w"], p["ac_b"] = lin(ks[3], num_neurons, 2 * noc)       # actor/critic head
    p["mem_w"], p["mem_b"] = lin(ks[4], num_neurons, c_mem)       # memory head
    return p


def _round8(n):
    return -(-n // 8) * 8


def _pack_biases(biases):
    """Pack bias vectors into one (B, 1) f32 buffer; every segment 8-aligned."""
    slices, cols, off = [], [], 0
    for b in biases:
        c = int(b.shape[0])
        pad = _round8(c)
        slices.append((off, c))
        cols.append(jnp.pad(b.astype(jnp.float32), (0, pad - c)))
        off += pad
    return jnp.concatenate(cols).reshape(-1, 1), tuple(slices)


# ---------------------------------------------------------------------------
# Forward pass — whole hot path in ONE Pallas kernel, no wrapper transposes
# ---------------------------------------------------------------------------
def static_dynamic_forward(params, x_nchw, noc, c_mem):
    N, C, H, W = x_nchw.shape
    HW = H * W
    two_noc = 2 * noc

    # NCHW is already channels-major per sample: free reshape, no data movement
    x = x_nchw.reshape(N, C, HW)

    # (HW, H) mean-over-W matrix, bf16 (1/W exact for power-of-two W here)
    pool = (jnp.kron(jnp.eye(H, dtype=jnp.float32),
                     jnp.ones((W, 1), jnp.float32)) / float(W)).astype(jnp.bfloat16)

    b_packed, bias_slices = _pack_biases(
        [params["theo_b"], params["prac_b0"], params["prac_b1"],
         params["ac_b"], params["mem_b"]])

    rep = lambda n: (0, 0)
    blk = lambda n: (n, 0, 0)

    ac_out, memp, memt = pl.pallas_call(
        functools.partial(_fused_forward_kernel, bias_slices=bias_slices),
        grid=(N,),
        out_shape=(
            jax.ShapeDtypeStruct((N, two_noc, H), jnp.float32),
            jax.ShapeDtypeStruct((N, c_mem, HW), jnp.float32),
            jax.ShapeDtypeStruct((N, c_mem, HW), jnp.float32),
        ),
        in_specs=[
            pl.BlockSpec((None, C, HW), blk),            # x slab (C, H*W) per sample
            pl.BlockSpec(pool.shape, rep),               # mean-over-W matrix
            pl.BlockSpec(params["theo_w"].shape, rep),
            pl.BlockSpec(params["prac_w0"].shape, rep),
            pl.BlockSpec(params["prac_w1"].shape, rep),
            pl.BlockSpec(params["ac_w"].shape, rep),
            pl.BlockSpec(params["mem_w"].shape, rep),
            pl.BlockSpec(b_packed.shape, rep),           # packed biases
        ],
        out_specs=(
            pl.BlockSpec((None, two_noc, H), blk),       # pooled actor/critic
            pl.BlockSpec((None, c_mem, HW), blk),        # practical memory
            pl.BlockSpec((None, c_mem, HW), blk),        # theoretical memory
        ),
        compiler_params=pltpu.CompilerParams(
            dimension_semantics=("parallel",),
        ),
    )(x, pool, params["theo_w"], params["prac_w0"], params["prac_w1"],
      params["ac_w"], params["mem_w"], b_packed)

    # --- actor/critic outputs (W eliminated by mean inside the kernel) ---
    action_distributions = ac_out[:, :noc, :]                     # narrow(1, 0, noc)
    # NOTE: the original narrows values starting at noc-1 (one channel overlap
    # with the actions); reproduced verbatim from the PyTorch code.
    values = ac_out[:, noc - 1: 2 * noc - 1, :].sum(-1).sum(-1)   # (N,)

    # --- memory outputs: already NCHW-ordered, free reshapes ---
    mem_prac = memp.reshape(N, c_mem, H, W)
    mem_theo = memt.reshape(N, c_mem, H, W)
    return action_distributions, values, (mem_prac, mem_theo)


# ---------------------------------------------------------------------------
# Pure-JAX reference at matching precision (bf16 matmuls, f32 elementwise)
# ---------------------------------------------------------------------------
def _reference_forward(params, x_nchw, noc, c_mem):
    N, C, H, W = x_nchw.shape
    f32 = jnp.float32
    x = x_nchw.reshape(N, C, H * W)

    def mm(wT, a):
        return jnp.einsum("oi,nip->nop", wT, a.astype(jnp.bfloat16),
                          preferred_element_type=f32)

    theo = _leaky_relu(mm(params["theo_w"], x) + params["theo_b"][None, :, None])
    prac = _leaky_relu(mm(params["prac_w0"], theo) + params["prac_b0"][None, :, None])
    prac = _leaky_relu(mm(params["prac_w1"], prac) + params["prac_b1"][None, :, None])
    ac = _leaky_relu(mm(params["ac_w"], prac) + params["ac_b"][None, :, None])
    memp = jnp.tanh(_leaky_relu(mm(params["mem_w"], prac) + params["mem_b"][None, :, None]))
    memt = jnp.tanh(theo)

    ac_q = ac.reshape(N, 2 * noc, H, W).astype(jnp.bfloat16).astype(f32)
    pooled = ac_q.mean(-1)                                        # (N, 2*noc, H)
    action_distributions = pooled[:, :noc, :]
    values = pooled[:, noc - 1: 2 * noc - 1, :].sum((-1, -2))
    return (action_distributions, values,
            memp.reshape(N, c_mem, H, W), memt.reshape(N, c_mem, H, W))


# ---------------------------------------------------------------------------
if __name__ == "__main__":
    N, C_IN, H, W = 2, 4, 16, 16
    C_MEM, NUM_NEURONS, NOC = 8, 32, 4

    key = jax.random.PRNGKey(0)
    kx, kp = jax.random.split(key)
    x = jax.random.normal(kx, (N, C_IN, H, W), jnp.float32)
    params = init_params(kp, C_IN, C_MEM, NUM_NEURONS, NOC)

    fwd = jax.jit(functools.partial(static_dynamic_forward, noc=NOC, c_mem=C_MEM))
    action_distributions, values, (mem_prac, mem_theo) = fwd(params, x)
    jax.block_until_ready((action_distributions, values, mem_prac, mem_theo))

    # shape sanity
    assert action_distributions.shape == (N, NOC, H)
    assert values.shape == (N,)
    assert mem_prac.shape == (N, C_MEM, H, W)
    assert mem_theo.shape == (N, C_MEM, H, W)
    assert bool(jnp.isfinite(action_distributions).all())
    assert bool(jnp.isfinite(values).all())
    assert bool(jnp.isfinite(mem_prac).all())
    assert bool(jnp.isfinite(mem_theo).all())

    # numerical check against a pure-JAX reference at matching precision
    ref_ad, ref_v, ref_mp, ref_mt = _reference_forward(params, x, NOC, C_MEM)
    assert bool(jnp.allclose(action_distributions, ref_ad, atol=2e-2, rtol=2e-2))
    assert bool(jnp.allclose(values, ref_v, atol=5e-1, rtol=2e-2))
    assert bool(jnp.allclose(mem_prac, ref_mp, atol=2e-2, rtol=2e-2))
    assert bool(jnp.allclose(mem_theo, ref_mt, atol=2e-2, rtol=2e-2))

    print("KERNEL_OK")
</pallas_src>

<mosaic_0001>
module attributes {stable_mosaic.version = 11 : i64} {
  func.func @_fused_forward_kernel(%arg0: i32, %arg1: memref<1x4x256xf32, #tpu.memory_space<vmem>>, %arg2: memref<256x16xbf16, #tpu.memory_space<vmem>>, %arg3: memref<8x4xbf16, #tpu.memory_space<vmem>>, %arg4: memref<32x8xbf16, #tpu.memory_space<vmem>>, %arg5: memref<32x32xbf16, #tpu.memory_space<vmem>>, %arg6: memref<8x32xbf16, #tpu.memory_space<vmem>>, %arg7: memref<8x32xbf16, #tpu.memory_space<vmem>>, %arg8: memref<88x1xf32, #tpu.memory_space<vmem>>, %arg9: memref<1x8x16xf32, #tpu.memory_space<vmem>>, %arg10: memref<1x8x256xf32, #tpu.memory_space<vmem>>, %arg11: memref<1x8x256xf32, #tpu.memory_space<vmem>>) attributes {dimension_semantics = [#tpu.dimension_semantics<parallel>], iteration_bounds = array<i64: 2>, scalar_prefetch = 0 : i64, scratch_operands = 0 : i64, tpu.core_type = #tpu.core_type<tc>, window_params = [{transform_indices = @transform_0, window_bounds = array<i64: 1, 4, 256>}, {pipeline_mode = #tpu.pipeline_mode<synchronous>, transform_indices = @transform_1, window_bounds = array<i64: 256, 16>}, {pipeline_mode = #tpu.pipeline_mode<synchronous>, transform_indices = @transform_2, window_bounds = array<i64: 8, 4>}, {pipeline_mode = #tpu.pipeline_mode<synchronous>, transform_indices = @transform_3, window_bounds = array<i64: 32, 8>}, {pipeline_mode = #tpu.pipeline_mode<synchronous>, transform_indices = @transform_4, window_bounds = array<i64: 32, 32>}, {pipeline_mode = #tpu.pipeline_mode<synchronous>, transform_indices = @transform_5, window_bounds = array<i64: 8, 32>}, {pipeline_mode = #tpu.pipeline_mode<synchronous>, transform_indices = @transform_6, window_bounds = array<i64: 8, 32>}, {pipeline_mode = #tpu.pipeline_mode<synchronous>, transform_indices = @transform_7, window_bounds = array<i64: 88, 1>}, {transform_indices = @transform_8, window_bounds = array<i64: 1, 8, 16>}, {transform_indices = @transform_9, window_bounds = array<i64: 1, 8, 256>}, {transform_indices = @transform_10, window_bounds = array<i64: 1, 8, 256>}]} {
    %c0 = arith.constant 0 : index
    %c0_0 = arith.constant 0 : index
    %c0_1 = arith.constant 0 : index
    %0 = vector.load %arg1[%c0, %c0_0, %c0_1] : memref<1x4x256xf32, #tpu.memory_space<vmem>>, vector<1x4x256xf32>
    %1 = vector.shape_cast %0 : vector<1x4x256xf32> to vector<4x256xf32>
    %2 = arith.truncf %1 : vector<4x256xf32> to vector<4x256xbf16>
    %c0_2 = arith.constant 0 : index
    %c0_3 = arith.constant 0 : index
    %3 = vector.load %arg3[%c0_2, %c0_3] : memref<8x4xbf16, #tpu.memory_space<vmem>>, vector<8x4xbf16>
    %cst = arith.constant dense<0.000000e+00> : vector<8x256xf32>
    %4 = tpu.matmul %3, %2, %cst {dimension_numbers = #tpu.dot_dimension_numbers<[1], [0], [0], [1], [0, 0, 1, 1], [], []>} : vector<8x4xbf16>, vector<4x256xbf16>, vector<8x256xf32> -> vector<8x256xf32>
    %c0_4 = arith.constant 0 : index
    %c0_5 = arith.constant 0 : index
    %5 = vector.load %arg8[%c0_4, %c0_5] : memref<88x1xf32, #tpu.memory_space<vmem>>, vector<8x1xf32>
    %6 = vector.broadcast %5 : vector<8x1xf32> to vector<8x256xf32>
    %7 = arith.addf %4, %6 : vector<8x256xf32>
    %cst_6 = arith.constant 0.000000e+00 : f32
    %8 = vector.broadcast %cst_6 : f32 to vector<8x256xf32>
    %9 = arith.cmpf ogt, %7, %8 : vector<8x256xf32>
    %cst_7 = arith.constant 0.00999999977 : f32
    %10 = vector.broadcast %cst_7 : f32 to vector<8x256xf32>
    %11 = arith.mulf %10, %7 : vector<8x256xf32>
    %12 = arith.select %9, %7, %11 : vector<8x256xi1>, vector<8x256xf32>
    %c0_8 = arith.constant 0 : index
    %c0_9 = arith.constant 0 : index
    %13 = vector.load %arg4[%c0_8, %c0_9] : memref<32x8xbf16, #tpu.memory_space<vmem>>, vector<32x8xbf16>
    %14 = arith.truncf %12 : vector<8x256xf32> to vector<8x256xbf16>
    %cst_10 = arith.constant dense<0.000000e+00> : vector<32x256xf32>
    %15 = tpu.matmul %13, %14, %cst_10 {dimension_numbers = #tpu.dot_dimension_numbers<[1], [0], [0], [1], [0, 0, 1, 1], [], []>} : vector<32x8xbf16>, vector<8x256xbf16>, vector<32x256xf32> -> vector<32x256xf32>
    %c8 = arith.constant 8 : index
    %c0_11 = arith.constant 0 : index
    %16 = vector.load %arg8[%c8, %c0_11] : memref<88x1xf32, #tpu.memory_space<vmem>>, vector<32x1xf32>
    %17 = vector.broadcast %16 : vector<32x1xf32> to vector<32x256xf32>
    %18 = arith.addf %15, %17 : vector<32x256xf32>
    %cst_12 = arith.constant 0.000000e+00 : f32
    %19 = vector.broadcast %cst_12 : f32 to vector<32x256xf32>
    %20 = arith.cmpf ogt, %18, %19 : vector<32x256xf32>
    %cst_13 = arith.constant 0.00999999977 : f32
    %21 = vector.broadcast %cst_13 : f32 to vector<32x256xf32>
    %22 = arith.mulf %21, %18 : vector<32x256xf32>
    %23 = arith.select %20, %18, %22 : vector<32x256xi1>, vector<32x256xf32>
    %c0_14 = arith.constant 0 : index
    %c0_15 = arith.constant 0 : index
    %24 = vector.load %arg5[%c0_14, %c0_15] : memref<32x32xbf16, #tpu.memory_space<vmem>>, vector<32x32xbf16>
    %25 = arith.truncf %23 : vector<32x256xf32> to vector<32x256xbf16>
    %cst_16 = arith.constant dense<0.000000e+00> : vector<32x256xf32>
    %26 = tpu.matmul %24, %25, %cst_16 {dimension_numbers = #tpu.dot_dimension_numbers<[1], [0], [0], [1], [0, 0, 1, 1], [], []>} : vector<32x32xbf16>, vector<32x256xbf16>, vector<32x256xf32> -> vector<32x256xf32>
    %c40 = arith.constant 40 : index
    %c0_17 = arith.constant 0 : index
    %27 = vector.load %arg8[%c40, %c0_17] : memref<88x1xf32, #tpu.memory_space<vmem>>, vector<32x1xf32>
    %28 = vector.broadcast %27 : vector<32x1xf32> to vector<32x256xf32>
    %29 = arith.addf %26, %28 : vector<32x256xf32>
    %cst_18 = arith.constant 0.000000e+00 : f32
    %30 = vector.broadcast %cst_18 : f32 to vector<32x256xf32>
    %31 = arith.cmpf ogt, %29, %30 : vector<32x256xf32>
    %cst_19 = arith.constant 0.00999999977 : f32
    %32 = vector.broadcast %cst_19 : f32 to vector<32x256xf32>
    %33 = arith.mulf %32, %29 : vector<32x256xf32>
    %34 = arith.select %31, %29, %33 : vector<32x256xi1>, vector<32x256xf32>
    %35 = arith.truncf %34 : vector<32x256xf32> to vector<32x256xbf16>
    %c0_20 = arith.constant 0 : index
    %c0_21 = arith.constant 0 : index
    %36 = vector.load %arg6[%c0_20, %c0_21] : memref<8x32xbf16, #tpu.memory_space<vmem>>, vector<8x32xbf16>
    %cst_22 = arith.constant dense<0.000000e+00> : vector<8x256xf32>
    %37 = tpu.matmul %36, %35, %cst_22 {dimension_numbers = #tpu.dot_dimension_numbers<[1], [0], [0], [1], [0, 0, 1, 1], [], []>} : vector<8x32xbf16>, vector<32x256xbf16>, vector<8x256xf32> -> vector<8x256xf32>
    %c72 = arith.constant 72 : index
    %c0_23 = arith.constant 0 : index
    %38 = vector.load %arg8[%c72, %c0_23] : memref<88x1xf32, #tpu.memory_space<vmem>>, vector<8x1xf32>
    %39 = vector.broadcast %38 : vector<8x1xf32> to vector<8x256xf32>
    %40 = arith.addf %37, %39 : vector<8x256xf32>
    %cst_24 = arith.constant 0.000000e+00 : f32
    %41 = vector.broadcast %cst_24 : f32 to vector<8x256xf32>
    %42 = arith.cmpf ogt, %40, %41 : vector<8x256xf32>
    %cst_25 = arith.constant 0.00999999977 : f32
    %43 = vector.broadcast %cst_25 : f32 to vector<8x256xf32>
    %44 = arith.mulf %43, %40 : vector<8x256xf32>
    %45 = arith.select %42, %40, %44 : vector<8x256xi1>, vector<8x256xf32>
    %c0_26 = arith.constant 0 : index
    %c0_27 = arith.constant 0 : index
    %46 = vector.load %arg7[%c0_26, %c0_27] : memref<8x32xbf16, #tpu.memory_space<vmem>>, vector<8x32xbf16>
    %cst_28 = arith.constant dense<0.000000e+00> : vector<8x256xf32>
    %47 = tpu.matmul %46, %35, %cst_28 {dimension_numbers = #tpu.dot_dimension_numbers<[1], [0], [0], [1], [0, 0, 1, 1], [], []>} : vector<8x32xbf16>, vector<32x256xbf16>, vector<8x256xf32> -> vector<8x256xf32>
    %c80 = arith.constant 80 : index
    %c0_29 = arith.constant 0 : index
    %48 = vector.load %arg8[%c80, %c0_29] : memref<88x1xf32, #tpu.memory_space<vmem>>, vector<8x1xf32>
    %49 = vector.broadcast %48 : vector<8x1xf32> to vector<8x256xf32>
    %50 = arith.addf %47, %49 : vector<8x256xf32>
    %cst_30 = arith.constant 0.000000e+00 : f32
    %51 = vector.broadcast %cst_30 : f32 to vector<8x256xf32>
    %52 = arith.cmpf ogt, %50, %51 : vector<8x256xf32>
    %cst_31 = arith.constant 0.00999999977 : f32
    %53 = vector.broadcast %cst_31 : f32 to vector<8x256xf32>
    %54 = arith.mulf %53, %50 : vector<8x256xf32>
    %55 = arith.select %52, %50, %54 : vector<8x256xi1>, vector<8x256xf32>
    %56 = math.tanh %55 : vector<8x256xf32>
    %57 = math.tanh %12 : vector<8x256xf32>
    %58 = arith.truncf %45 : vector<8x256xf32> to vector<8x256xbf16>
    %c0_32 = arith.constant 0 : index
    %c0_33 = arith.constant 0 : index
    %59 = vector.load %arg2[%c0_32, %c0_33] : memref<256x16xbf16, #tpu.memory_space<vmem>>, vector<256x16xbf16>
    %cst_34 = arith.constant dense<0.000000e+00> : vector<8x16xf32>
    %60 = tpu.matmul %58, %59, %cst_34 {dimension_numbers = #tpu.dot_dimension_numbers<[1], [0], [0], [1], [0, 0, 1, 1], [], []>} : vector<8x256xbf16>, vector<256x16xbf16>, vector<8x16xf32> -> vector<8x16xf32>
    %c0_35 = arith.constant 0 : index
    %c0_36 = arith.constant 0 : index
    %c0_37 = arith.constant 0 : index
    %61 = vector.load %arg9[%c0_35, %c0_36, %c0_37] : memref<1x8x16xf32, #tpu.memory_space<vmem>>, vector<1x8x16xf32>
    %62 = vector.shape_cast %61 : vector<1x8x16xf32> to vector<8x16xf32>
    %63 = vector.shape_cast %60 : vector<8x16xf32> to vector<1x8x16xf32>
    tpu.vector_store %arg9[%c0_35, %c0_36, %c0_37], %63 {strides = array<i32>} : memref<1x8x16xf32, #tpu.memory_space<vmem>>, vector<1x8x16xf32>,
    %c0_38 = arith.constant 0 : index
    %c0_39 = arith.constant 0 : index
    %c0_40 = arith.constant 0 : index
    %64 = vector.load %arg10[%c0_38, %c0_39, %c0_40] : memref<1x8x256xf32, #tpu.memory_space<vmem>>, vector<1x8x256xf32>
    %65 = vector.shape_cast %64 : vector<1x8x256xf32> to vector<8x256xf32>
    %66 = vector.shape_cast %56 : vector<8x256xf32> to vector<1x8x256xf32>
    tpu.vector_store %arg10[%c0_38, %c0_39, %c0_40], %66 {strides = array<i32>} : memref<1x8x256xf32, #tpu.memory_space<vmem>>, vector<1x8x256xf32>,
    %c0_41 = arith.constant 0 : index
    %c0_42 = arith.constant 0 : index
    %c0_43 = arith.constant 0 : index
    %67 = vector.load %arg11[%c0_41, %c0_42, %c0_43] : memref<1x8x256xf32, #tpu.memory_space<vmem>>, vector<1x8x256xf32>
    %68 = vector.shape_cast %67 : vector<1x8x256xf32> to vector<8x256xf32>
    %69 = vector.shape_cast %57 : vector<8x256xf32> to vector<1x8x256xf32>
    tpu.vector_store %arg11[%c0_41, %c0_42, %c0_43], %69 {strides = array<i32>} : memref<1x8x256xf32, #tpu.memory_space<vmem>>, vector<1x8x256xf32>,
    return
  }
  func.func @transform_0(%arg0: i32) -> (i32, i32, i32) {
    %c0_i32 = arith.constant 0 : i32
    %c0_i32_0 = arith.constant 0 : i32
    %c0_i32_1 = arith.constant 0 : i32
    return %arg0, %c0_i32, %c0_i32_0 : i32, i32, i32
  }
  func.func @transform_1(%arg0: i32) -> (i32, i32) {
    %c0_i32 = arith.constant 0 : i32
    %c0_i32_0 = arith.constant 0 : i32
    %c0_i32_1 = arith.constant 0 : i32
    return %c0_i32, %c0_i32_0 : i32, i32
  }
  func.func @transform_2(%arg0: i32) -> (i32, i32) {
    %c0_i32 = arith.constant 0 : i32
    %c0_i32_0 = arith.constant 0 : i32
    %c0_i32_1 = arith.constant 0 : i32
    return %c0_i32, %c0_i32_0 : i32, i32
  }
  func.func @transform_3(%arg0: i32) -> (i32, i32) {
    %c0_i32 = arith.constant 0 : i32
    %c0_i32_0 = arith.constant 0 : i32
    %c0_i32_1 = arith.constant 0 : i32
    return %c0_i32, %c0_i32_0 : i32, i32
  }
  func.func @transform_4(%arg0: i32) -> (i32, i32) {
    %c0_i32 = arith.constant 0 : i32
    %c0_i32_0 = arith.constant 0 : i32
    %c0_i32_1 = arith.constant 0 : i32
    return %c0_i32, %c0_i32_0 : i32, i32
  }
  func.func @transform_5(%arg0: i32) -> (i32, i32) {
    %c0_i32 = arith.constant 0 : i32
    %c0_i32_0 = arith.constant 0 : i32
    %c0_i32_1 = arith.constant 0 : i32
    return %c0_i32, %c0_i32_0 : i32, i32
  }
  func.func @transform_6(%arg0: i32) -> (i32, i32) {
    %c0_i32 = arith.constant 0 : i32
    %c0_i32_0 = arith.constant 0 : i32
    %c0_i32_1 = arith.constant 0 : i32
    return %c0_i32, %c0_i32_0 : i32, i32
  }
  func.func @transform_7(%arg0: i32) -> (i32, i32) {
    %c0_i32 = arith.constant 0 : i32
    %c0_i32_0 = arith.constant 0 : i32
    %c0_i32_1 = arith.constant 0 : i32
    return %c0_i32, %c0_i32_0 : i32, i32
  }
  func.func @transform_8(%arg0: i32) -> (i32, i32, i32) {
    %c0_i32 = arith.constant 0 : i32
    %c0_i32_0 = arith.constant 0 : i32
    %c0_i32_1 = arith.constant 0 : i32
    return %arg0, %c0_i32, %c0_i32_0 : i32, i32, i32
  }
  func.func @transform_9(%arg0: i32) -> (i32, i32, i32) {
    %c0_i32 = arith.constant 0 : i32
    %c0_i32_0 = arith.constant 0 : i32
    %c0_i32_1 = arith.constant 0 : i32
    return %arg0, %c0_i32, %c0_i32_0 : i32, i32, i32
  }
  func.func @transform_10(%arg0: i32) -> (i32, i32, i32) {
    %c0_i32 = arith.constant 0 : i32
    %c0_i32_0 = arith.constant 0 : i32
    %c0_i32_1 = arith.constant 0 : i32
    return %arg0, %c0_i32, %c0_i32_0 : i32, i32, i32
  }
}

</mosaic_0001>

<llo_original>
// kernel: static_dynamic_forward.1
$region0: #{static_dynamic_forward.1}
  #allocation0 [shape = 'u32[]', space=smem, size = 0x4, offset = 0x4, fixed_abs, tag = 'smem constant byte address 0x4 - core index']
  #allocation1 [shape = 'u32[144,128]{1,0:T(1,128)}', space=vmem, size = 0x12000, scoped, tag = 'internal scratch']
  %s0 = inlined_call_operand.vmem [shape: f32[2,4,256], index: 0, kind: input, shape index: {}]
  %s1 = inlined_call_operand.vmem [shape: bf16[256,16], index: 1, kind: input, shape index: {}]
  %s2 = inlined_call_operand.vmem [shape: bf16[8,4], index: 2, kind: input, shape index: {}]
  %s3 = inlined_call_operand.vmem [shape: bf16[32,8], index: 3, kind: input, shape index: {}]
  %s4 = inlined_call_operand.vmem [shape: bf16[32,32], index: 4, kind: input, shape index: {}]
  %s5 = inlined_call_operand.vmem [shape: bf16[8,32], index: 5, kind: input, shape index: {}]
  %s6 = inlined_call_operand.vmem [shape: bf16[8,32], index: 6, kind: input, shape index: {}]
  %s7 = inlined_call_operand.vmem [shape: f32[88,1], index: 7, kind: input, shape index: {}]
  %s8 = inlined_call_operand.vmem [shape: f32[2,8,16], index: 8, kind: output, shape index: {0}]
  %s9 = inlined_call_operand.vmem [shape: f32[2,8,256], index: 9, kind: output, shape index: {1}]
  %s10 = inlined_call_operand.vmem [shape: f32[2,8,256], index: 10, kind: output, shape index: {2}]
  %11 = xla_tuple %s8, %s9, %s10
  %s12 = sld [smem:[#allocation0]]
  $region81: #{static_dynamic_forward.1} parent=0
    _
  %s14 = ssub.s32 1, %s12
  %s15 = scalar_select 0, %s14, %s12
  loop: start=0, step=1, limit=4
  $region2: #{static_dynamic_forward.1} parent=0 // loop_pre_header
    _
  $region3: #{static_dynamic_forward.1} parent=0 // loop_header
    %s17 = sphi 0, %s21
    %p18 = scmp.ge.s32.totalorder %s17, 4
    %s27 = sphi 0, %s29
    %s30 = sphi 0, %s27
    %s31 = sphi 0, %s30
    %s47 = sphi 0, %s31
    %s51 = sphi 0, %s51
    %s53 = sphi 0, %s51
    %s54 = sphi 0, %s53
    %s68 = sphi 0, %s54
    %s72 = sphi 0, %s72
    %s74 = sphi 0, %s72
    %s75 = sphi 0, %s74
    %s89 = sphi 0, %s75
    %s93 = sphi 0, %s93
    %s95 = sphi 0, %s93
    %s96 = sphi 0, %s95
    %s110 = sphi 0, %s96
    %s114 = sphi 0, %s114
    %s116 = sphi 0, %s114
    %s117 = sphi 0, %s116
    %s131 = sphi 0, %s117
    %s135 = sphi 0, %s135
    %s137 = sphi 0, %s135
    %s138 = sphi 0, %s137
    %s152 = sphi 0, %s138
    %s156 = sphi 0, %s156
    %s158 = sphi 0, %s156
    %s159 = sphi 0, %s158
    %s173 = sphi 0, %s159
    %s177 = sphi 0, %s177
    %s179 = sphi 0, %s177
    %s180 = sphi 0, %s179
    %s194 = sphi 0, %s180
    %s200 = sphi 0, %s202
    %s203 = sphi 0, %s200
    %s204 = sphi 0, %s203
    %s220 = sphi 0, %s204
    %s226 = sphi 0, %s228
    %s229 = sphi 0, %s226
    %s230 = sphi 0, %s229
    %s246 = sphi 0, %s230
    %s252 = sphi 0, %s254
    %s255 = sphi 0, %s252
    %s256 = sphi 0, %s255
    %s272 = sphi 0, %s256
  $region4: #{static_dynamic_forward.1} parent=0 // loop_header_branch
    %20 = sbr.rel (%p18) target = $region8
  $region5: #{static_dynamic_forward.1} parent=0 // loop_body
    %s22 = ssub.s32 %s17, 1
    %s23 = ssub.s32 %s17, 2
    %s24 = sadd.s32 %s17, 1
    %s25 = ssub.s32 %s17, %s24
    %p26 = scmp.eq.s32.totalorder %s25, 0
    %s28 = sadd.s32 %s27, 1
    %s29 = scalar_select %p26, %s27, %s28
    %p32 = pneg %p26
    %p33 = scmp.eq.s32.totalorder %s17, 1
    %p34 = por %p32, %p33
    %p35 = scmp.ne.s32.totalorder %s27, %s30
    %p36 = scmp.eq.s32.totalorder %s17, 0
    %p37 = por %p35, %p36
    %p38 = scmp.ne.s32.totalorder %s27, %s30
    %p39 = scmp.eq.s32.totalorder %s22, 1
    %p40 = por %p38, %p39
    %p41 = scmp.ne.s32.totalorder %s30, %s31
    %p42 = scmp.eq.s32.totalorder %s22, 0
    %p43 = por %p41, %p42
    %p44 = scmp.ne.s32.totalorder %s30, %s31
    %p45 = scmp.eq.s32.totalorder %s23, 1
    %p46 = por %p44, %p45
    %p48 = scmp.ne.s32.totalorder %s31, %s47
    %p49 = scmp.eq.s32.totalorder %s23, 0
    %p50 = por %p48, %p49
    %s52 = sadd.s32 %s51, 1
    %p55 = scmp.eq.s32.totalorder %s17, 1
    %p56 = scmp.ne.s32.totalorder %s51, %s53
    %p57 = scmp.eq.s32.totalorder %s17, 0
    %p58 = por %p56, %p57
    %p59 = scmp.ne.s32.totalorder %s51, %s53
    %p60 = scmp.eq.s32.totalorder %s22, 1
    %p61 = por %p59, %p60
    %p62 = scmp.ne.s32.totalorder %s53, %s54
    %p63 = scmp.eq.s32.totalorder %s22, 0
    %p64 = por %p62, %p63
    %p65 = scmp.ne.s32.totalorder %s53, %s54
    %p66 = scmp.eq.s32.totalorder %s23, 1
    %p67 = por %p65, %p66
    %p69 = scmp.ne.s32.totalorder %s54, %s68
    %p70 = scmp.eq.s32.totalorder %s23, 0
    %p71 = por %p69, %p70
    %s73 = sadd.s32 %s72, 1
    %p76 = scmp.eq.s32.totalorder %s17, 1
    %p77 = scmp.ne.s32.totalorder %s72, %s74
    %p78 = scmp.eq.s32.totalorder %s17, 0
    %p79 = por %p77, %p78
    %p80 = scmp.ne.s32.totalorder %s72, %s74
    %p81 = scmp.eq.s32.totalorder %s22, 1
    %p82 = por %p80, %p81
    %p83 = scmp.ne.s32.totalorder %s74, %s75
    %p84 = scmp.eq.s32.totalorder %s22, 0
    %p85 = por %p83, %p84
    %p86 = scmp.ne.s32.totalorder %s74, %s75
    %p87 = scmp.eq.s32.totalorder %s23, 1
    %p88 = por %p86, %p87
    %p90 = scmp.ne.s32.totalorder %s75, %s89
    %p91 = scmp.eq.s32.totalorder %s23, 0
    %p92 = por %p90, %p91
    %s94 = sadd.s32 %s93, 1
    %p97 = scmp.eq.s32.totalorder %s17, 1
    %p98 = scmp.ne.s32.totalorder %s93, %s95
    %p99 = scmp.eq.s32.totalorder %s17, 0
    %p100 = por %p98, %p99
    %p101 = scmp.ne.s32.totalorder %s93, %s95
    %p102 = scmp.eq.s32.totalorder %s22, 1
    %p103 = por %p101, %p102
    %p104 = scmp.ne.s32.totalorder %s95, %s96
    %p105 = scmp.eq.s32.totalorder %s22, 0
    %p106 = por %p104, %p105
    %p107 = scmp.ne.s32.totalorder %s95, %s96
    %p108 = scmp.eq.s32.totalorder %s23, 1
    %p109 = por %p107, %p108
    %p111 = scmp.ne.s32.totalorder %s96, %s110
    %p112 = scmp.eq.s32.totalorder %s23, 0
    %p113 = por %p111, %p112
    %s115 = sadd.s32 %s114, 1
    %p118 = scmp.eq.s32.totalorder %s17, 1
    %p119 = scmp.ne.s32.totalorder %s114, %s116
    %p120 = scmp.eq.s32.totalorder %s17, 0
    %p121 = por %p119, %p120
    %p122 = scmp.ne.s32.totalorder %s114, %s116
    %p123 = scmp.eq.s32.totalorder %s22, 1
    %p124 = por %p122, %p123
    %p125 = scmp.ne.s32.totalorder %s116, %s117
    %p126 = scmp.eq.s32.totalorder %s22, 0
    %p127 = por %p125, %p126
    %p128 = scmp.ne.s32.totalorder %s116, %s117
    %p129 = scmp.eq.s32.totalorder %s23, 1
    %p130 = por %p128, %p129
    %p132 = scmp.ne.s32.totalorder %s117, %s131
    %p133 = scmp.eq.s32.totalorder %s23, 0
    %p134 = por %p132, %p133
    %s136 = sadd.s32 %s135, 1
    %p139 = scmp.eq.s32.totalorder %s17, 1
    %p140 = scmp.ne.s32.totalorder %s135, %s137
    %p141 = scmp.eq.s32.totalorder %s17, 0
    %p142 = por %p140, %p141
    %p143 = scmp.ne.s32.totalorder %s135, %s137
    %p144 = scmp.eq.s32.totalorder %s22, 1
    %p145 = por %p143, %p144
    %p146 = scmp.ne.s32.totalorder %s137, %s138
    %p147 = scmp.eq.s32.totalorder %s22, 0
    %p148 = por %p146, %p147
    %p149 = scmp.ne.s32.totalorder %s137, %s138
    %p150 = scmp.eq.s32.totalorder %s23, 1
    %p151 = por %p149, %p150
    %p153 = scmp.ne.s32.totalorder %s138, %s152
    %p154 = scmp.eq.s32.totalorder %s23, 0
    %p155 = por %p153, %p154
    %s157 = sadd.s32 %s156, 1
    %p160 = scmp.eq.s32.totalorder %s17, 1
    %p161 = scmp.ne.s32.totalorder %s156, %s158
    %p162 = scmp.eq.s32.totalorder %s17, 0
    %p163 = por %p161, %p162
    %p164 = scmp.ne.s32.totalorder %s156, %s158
    %p165 = scmp.eq.s32.totalorder %s22, 1
    %p166 = por %p164, %p165
    %p167 = scmp.ne.s32.totalorder %s158, %s159
    %p168 = scmp.eq.s32.totalorder %s22, 0
    %p169 = por %p167, %p168
    %p170 = scmp.ne.s32.totalorder %s158, %s159
    %p171 = scmp.eq.s32.totalorder %s23, 1
    %p172 = por %p170, %p171
    %p174 = scmp.ne.s32.totalorder %s159, %s173
    %p175 = scmp.eq.s32.totalorder %s23, 0
    %p176 = por %p174, %p175
    %s178 = sadd.s32 %s177, 1
    %p181 = scmp.eq.s32.totalorder %s17, 1
    %p182 = scmp.ne.s32.totalorder %s177, %s179
    %p183 = scmp.eq.s32.totalorder %s17, 0
    %p184 = por %p182, %p183
    %p185 = scmp.ne.s32.totalorder %s177, %s179
    %p186 = scmp.eq.s32.totalorder %s22, 1
    %p187 = por %p185, %p186
    %p188 = scmp.ne.s32.totalorder %s179, %s180
    %p189 = scmp.eq.s32.totalorder %s22, 0
    %p190 = por %p188, %p189
    %p191 = scmp.ne.s32.totalorder %s179, %s180
    %p192 = scmp.eq.s32.totalorder %s23, 1
    %p193 = por %p191, %p192
    %p195 = scmp.ne.s32.totalorder %s180, %s194
    %p196 = scmp.eq.s32.totalorder %s23, 0
    %p197 = por %p195, %p196
    %s198 = ssub.s32 %s17, %s24
    %p199 = scmp.eq.s32.totalorder %s198, 0
    %s201 = sadd.s32 %s200, 1
    %s202 = scalar_select %p199, %s200, %s201
    %p205 = pneg %p199
    %p206 = scmp.eq.s32.totalorder %s17, 1
    %p207 = por %p205, %p206
    %p208 = scmp.ne.s32.totalorder %s200, %s203
    %p209 = scmp.eq.s32.totalorder %s17, 0
    %p210 = por %p208, %p209
    %p211 = scmp.ne.s32.totalorder %s200, %s203
    %p212 = scmp.eq.s32.totalorder %s22, 1
    %p213 = por %p211, %p212
    %p214 = scmp.ne.s32.totalorder %s203, %s204
    %p215 = scmp.eq.s32.totalorder %s22, 0
    %p216 = por %p214, %p215
    %p217 = scmp.ne.s32.totalorder %s203, %s204
    %p218 = scmp.eq.s32.totalorder %s23, 1
    %p219 = por %p217, %p218
    %p221 = scmp.ne.s32.totalorder %s204, %s220
    %p222 = scmp.eq.s32.totalorder %s23, 0
    %p223 = por %p221, %p222
    %s224 = ssub.s32 %s17, %s24
    %p225 = scmp.eq.s32.totalorder %s224, 0
    %s227 = sadd.s32 %s226, 1
    %s228 = scalar_select %p225, %s226, %s227
    %p231 = pneg %p225
    %p232 = scmp.eq.s32.totalorder %s17, 1
    %p233 = por %p231, %p232
    %p234 = scmp.ne.s32.totalorder %s226, %s229
    %p235 = scmp.eq.s32.totalorder %s17, 0
    %p236 = por %p234, %p235
    %p237 = scmp.ne.s32.totalorder %s226, %s229
    %p238 = scmp.eq.s32.totalorder %s22, 1
    %p239 = por %p237, %p238
    %p240 = scmp.ne.s32.totalorder %s229, %s230
    %p241 = scmp.eq.s32.totalorder %s22, 0
    %p242 = por %p240, %p241
    %p243 = scmp.ne.s32.totalorder %s229, %s230
    %p244 = scmp.eq.s32.totalorder %s23, 1
    %p245 = por %p243, %p244
    %p247 = scmp.ne.s32.totalorder %s230, %s246
    %p248 = scmp.eq.s32.totalorder %s23, 0
    %p249 = por %p247, %p248
    %s250 = ssub.s32 %s17, %s24
    %p251 = scmp.eq.s32.totalorder %s250, 0
    %s253 = sadd.s32 %s252, 1
    %s254 = scalar_select %p251, %s252, %s253
    %p257 = pneg %p251
    %p258 = scmp.eq.s32.totalorder %s17, 1
    %p259 = por %p257, %p258
    %p260 = scmp.ne.s32.totalorder %s252, %s255
    %p261 = scmp.eq.s32.totalorder %s17, 0
    %p262 = por %p260, %p261
    %p263 = scmp.ne.s32.totalorder %s252, %s255
    %p264 = scmp.eq.s32.totalorder %s22, 1
    %p265 = por %p263, %p264
    %p266 = scmp.ne.s32.totalorder %s255, %s256
    %p267 = scmp.eq.s32.totalorder %s22, 0
    %p268 = por %p266, %p267
    %p269 = scmp.ne.s32.totalorder %s255, %s256
    %p270 = scmp.eq.s32.totalorder %s23, 1
    %p271 = por %p269, %p270
    %p273 = scmp.ne.s32.totalorder %s256, %s272
    %p274 = scmp.eq.s32.totalorder %s23, 0
    %p275 = por %p273, %p274
    %p276 = scmp.le.s32.totalorder 1, %s17
    %p277 = scmp.lt.s32.totalorder %s17, 3
    %p278 = pnand %p276, %p277
    %p279 = pneg %p278
    // Predicated region
    $region9: #{static_dynamic_forward.1} parent=5 // pred_check
      _
    $region10: #{static_dynamic_forward.1} parent=5 // pred_check_branch
      %281 = sbr.rel (%p278) target = $region12
    $region11: #{static_dynamic_forward.1} parent=5 // pred_region
      %s282 = ssub.s32 %s17, 1
      // Predicated region
      $region13: #{static_dynamic_forward.1} parent=11 // pred_check
        %p283 = pneg %p64
      $region14: #{static_dynamic_forward.1} parent=11 // pred_check_branch
        %285 = sbr.rel (%p283) target = $region16
      $region15: #{static_dynamic_forward.1} parent=11 // pred_region
        _
      $region16: #{static_dynamic_forward.1} parent=11 // pred_fallthru
        _
      // Predicated region
      $region17: #{static_dynamic_forward.1} parent=11 // pred_check
        %p286 = pneg %p85
      $region18: #{static_dynamic_forward.1} parent=11 // pred_check_branch
        %288 = sbr.rel (%p286) target = $region20
      $region19: #{static_dynamic_forward.1} parent=11 // pred_region
        _
      $region20: #{static_dynamic_forward.1} parent=11 // pred_fallthru
        _
      // Predicated region
      $region21: #{static_dynamic_forward.1} parent=11 // pred_check
        %p289 = pneg %p106
      $region22: #{static_dynamic_forward.1} parent=11 // pred_check_branch
        %291 = sbr.rel (%p289) target = $region24
      $region23: #{static_dynamic_forward.1} parent=11 // pred_region
        _
      $region24: #{static_dynamic_forward.1} parent=11 // pred_fallthru
        _
      // Predicated region
      $region25: #{static_dynamic_forward.1} parent=11 // pred_check
        %p292 = pneg %p127
      $region26: #{static_dynamic_forward.1} parent=11 // pred_check_branch
        %294 = sbr.rel (%p292) target = $region28
      $region27: #{static_dynamic_forward.1} parent=11 // pred_region
        _
      $region28: #{static_dynamic_forward.1} parent=11 // pred_fallthru
        _
      // Predicated region
      $region29: #{static_dynamic_forward.1} parent=11 // pred_check
        %p295 = pneg %p148
      $region30: #{static_dynamic_forward.1} parent=11 // pred_check_branch
        %297 = sbr.rel (%p295) target = $region32
      $region31: #{static_dynamic_forward.1} parent=11 // pred_region
        _
      $region32: #{static_dynamic_forward.1} parent=11 // pred_fallthru
        _
      // Predicated region
      $region33: #{static_dynamic_forward.1} parent=11 // pred_check
        %p298 = pneg %p169
      $region34: #{static_dynamic_forward.1} parent=11 // pred_check_branch
        %300 = sbr.rel (%p298) target = $region36
      $region35: #{static_dynamic_forward.1} parent=11 // pred_region
        _
      $region36: #{static_dynamic_forward.1} parent=11 // pred_fallthru
        _
      // Predicated region
      $region37: #{static_dynamic_forward.1} parent=11 // pred_check
        %p301 = pneg %p190
      $region38: #{static_dynamic_forward.1} parent=11 // pred_check_branch
        %303 = sbr.rel (%p301) target = $region40
      $region39: #{static_dynamic_forward.1} parent=11 // pred_region
        _
      $region40: #{static_dynamic_forward.1} parent=11 // pred_fallthru
        _
    $region12: #{static_dynamic_forward.1} parent=5 // pred_fallthru
      _
    %p304 = scmp.lt.s32.totalorder %s17, 2
    // Predicated region
    $region41: #{static_dynamic_forward.1} parent=5 // pred_check
      %p305 = pneg %p304
    $region42: #{static_dynamic_forward.1} parent=5 // pred_check_branch
      %307 = sbr.rel (%p305) target = $region44
    $region43: #{static_dynamic_forward.1} parent=5 // pred_region
      // Predicated region
      $region45: #{static_dynamic_forward.1} parent=43 // pred_check
        %p308 = pneg %p37
      $region46: #{static_dynamic_forward.1} parent=43 // pred_check_branch
        %310 = sbr.rel (%p308) target = $region48
      $region47: #{static_dynamic_forward.1} parent=43 // pred_region
        %p311 = scmp.lt.s32.totalorder %s17, 1
        %s312 = scalar_select %p311, %s17, 1
        %s313 = smul.addr %s312, 2
        %s314 = smul.addr %s313, 4
        %s315 = scalar_lea.vmem %s0, %s314
      $region48: #{static_dynamic_forward.1} parent=43 // pred_fallthru
        _
    $region44: #{static_dynamic_forward.1} parent=5 // pred_fallthru
      _
    %p316 = scmp.le.s32.totalorder 1, %s17
    %p317 = scmp.lt.s32.totalorder %s17, 3
    %p318 = pnand %p316, %p317
    %p319 = pneg %p318
    // Predicated region
    $region49: #{static_dynamic_forward.1} parent=5 // pred_check
      _
    $region50: #{static_dynamic_forward.1} parent=5 // pred_check_branch
      %321 = sbr.rel (%p318) target = $region52
    $region51: #{static_dynamic_forward.1} parent=5 // pred_region
      %s322 = ssub.s32 %s17, 1
      %p323 = scmp.lt.s32.totalorder %s22, 1
      %s324 = scalar_select %p323, %s22, 1
      %s325 = smul.addr %s324, 2
      %s326 = smul.addr %s325, 4
      %s327 = scalar_lea.vmem %s0, %s326
      %p328 = pneg %p43
      %p329 = pneg %p40
      %p330 = pneg %p64
      %p331 = pneg %p61
      %p332 = pneg %p85
      %p333 = pneg %p82
      %p334 = pneg %p106
      %p335 = pneg %p103
      %p336 = pneg %p127
      %p337 = pneg %p124
      %p338 = pneg %p148
      %p339 = pneg %p145
      %p340 = pneg %p169
      %p341 = pneg %p166
      %p342 = pneg %p190
      %p343 = pneg %p187
      %p344 = pneg %p216
      %p345 = pneg %p213
      %p346 = scmp.lt.s32.totalorder %s22, 1
      %s347 = scalar_select %p346, %s22, 1
      %s348 = smul.addr %s347, 8
      %s349 = scalar_lea.vmem %s8, %s348
      %p350 = pneg %p242
      %p351 = pneg %p239
      %p352 = scmp.lt.s32.totalorder %s22, 1
      %s353 = scalar_select %p352, %s22, 1
      %s354 = smul.addr %s353, 2
      %s355 = smul.addr %s354, 8
      %s356 = scalar_lea.vmem %s9, %s355
      %p357 = pneg %p268
      %p358 = pneg %p265
      %p359 = scmp.lt.s32.totalorder %s22, 1
      %s360 = scalar_select %p359, %s22, 1
      %s361 = smul.addr %s360, 2
      %s362 = smul.addr %s361, 8
      %s363 = scalar_lea.vmem %s10, %s362
      %p364 = scmp.lt.s32.totalorder %s22, 1
      %s365 = scalar_select %p364, %s22, 1
      %s366 = smul.addr %s365, 2
      %s367 = smul.addr %s366, 4
      %s368 = scalar_lea.vmem %s0, %s367
      %p369 = scmp.lt.s32.totalorder %s22, 1
      %s370 = scalar_select %p369, %s22, 1
      %s371 = smul.addr %s370, 8
      %s372 = scalar_lea.vmem %s8, %s371
      %p373 = scmp.lt.s32.totalorder %s22, 1
      %s374 = scalar_select %p373, %s22, 1
      %s375 = smul.addr %s374, 2
      %s376 = smul.addr %s375, 8
      %s377 = scalar_lea.vmem %s9, %s376
      %p378 = scmp.lt.s32.totalorder %s22, 1
      %s379 = scalar_select %p378, %s22, 1
      %s380 = smul.addr %s379, 2
      %s381 = smul.addr %s380, 8
      %s382 = scalar_lea.vmem %s10, %s381
      %v384 = vld [vmem:[%s368] sm:$0xff]
      %v386 = vcombine.high %v384, %v384
      %v388 = vpack.c.bf16 %v384, %v384
      %v389 = vpack.c.bf16 %v386, %v386
      %v390 = vld [vmem:[%s2] sm:$0xf]
      %v391 = vld [vmem:[%s7] sm:$0xff]
      %393 = vset.pattern.permute.xlu0 0
      %394 = vperm.xlu0 %393, %v391
      %v395 = vpop.permute.xlu0 %394
      %vm397 = vcmask 31744
      %v399 = vsel %vm397, %v390, 0
      %vm401 = vcmask 1041408
      %v403 = vsel %vm401, %v388, 0
      %v406 = vsel %vm401, %v389, 0
      %408 = vmatprep.subr.bf16.mxu0 0
      %409 = vmatpush1.bf16.msra.mxu0 0
      %410 = vmatprep.subr.bf16.mxu0 0
      %411 = vmatpush1.bf16.msra.mxu0 0
      %412 = vmatprep.subr.bf16.mxu0 0
      %413 = vmatpush1.bf16.msra.mxu0 0
      %414 = vmatprep.subr.bf16.mxu0 0
      %415 = vmatpush1.bf16.msra.mxu0 0
      %416 = vmatprep.subr.bf16.mxu0 0
      %417 = vmatpush1.bf16.msra.mxu0 0
      %418 = vmatprep.subr.bf16.mxu0 0
      %419 = vmatpush1.bf16.msra.mxu0 0
      %420 = vmatprep.subr.bf16.mxu0 0
      %421 = vmatpush1.bf16.msra.mxu0 0
      %422 = vmatprep.subr.bf16.mxu0 %v406
      %423 = vmatpush1.bf16.msra.mxu0 %v403
      %424 = vmatprep.subr.bf16.mxu0 0
      %425 = vmatpush2.bf16.msra.mxu0 0
      %426 = vmatprep.subr.bf16.mxu0 0
      %427 = vmatpush2.bf16.msra.mxu0 0
      %428 = vmatprep.subr.bf16.mxu0 0
      %429 = vmatpush2.bf16.msra.mxu0 0
      %430 = vmatprep.subr.bf16.mxu0 0
      %431 = vmatpush2.bf16.msra.mxu0 0
      %432 = vmatprep.subr.bf16.mxu0 0
      %433 = vmatpush2.bf16.msra.mxu0 0
      %434 = vmatprep.subr.bf16.mxu0 0
      %435 = vmatpush2.bf16.msra.mxu0 0
      %436 = vmatprep.subr.bf16.mxu0 0
      %437 = vmatpush2.bf16.msra.mxu0 0
      %438 = vmatprep.subr.bf16.mxu0 0
      %439 = vmatpush2.bf16.msra.mxu0 0
      %440 = vmatprep.mubr.bf16.mxu0 0
      %441 = vmatmul.mubr.bf16.gmra.mxu0 %v399
      %v442 = vpop.f32.mrf.mxu0
      %v443 = vadd.f32 %v395, %v442
      %v444 = vpop.f32.mrf.mxu0
      %v445 = vadd.f32 %v395, %v444
      %v446 = vpop.f32.mrf.mxu0
      %v447 = vpop.f32.mrf.mxu0
      %448 = vdwg.mxu0
      %vm449 = vcmp.gt.f32.partialorder %v443, 0.0
      %vm450 = vcmp.gt.f32.partialorder %v445, 0.0
      %v451 = vmul.f32 %v443, 0.01
      %v452 = vmul.f32 %v445, 0.01
      %v453 = vsel %vm449, %v443, %v451
      %v454 = vsel %vm450, %v445, %v452
      %v455 = vld [vmem:[%s3] sm:$0xf]
      %v456 = vld [vmem:[%s3 + $0x4] sm:$0xf]
      %v457 = vld [vmem:[%s3 + $0x8] sm:$0xf]
      %v458 = vld [vmem:[%s3 + $0xc] sm:$0xf]
      %v459 = vpack.c.bf16 %v453, %v453
      %v460 = vpack.c.bf16 %v454, %v454
      %v461 = vld [vmem:[%s7 + $0x8] sm:$0xff]
      %v462 = vld [vmem:[%s7 + $0x10] sm:$0xff]
      %v463 = vld [vmem:[%s7 + $0x18] sm:$0xff]
      %v464 = vld [vmem:[%s7 + $0x20] sm:$0xff]
      %466 = vset.pattern.permute.xlu0 0
      %467 = vperm.xlu0 %466, %v461
      %v468 = vpop.permute.xlu0 %467
      %471 = vset.pattern.permute.xlu0 0
      %472 = vperm.xlu0 %471, %v462
      %v473 = vpop.permute.xlu0 %472
      %476 = vset.pattern.permute.xlu0 0
      %477 = vperm.xlu0 %476, %v463
      %v478 = vpop.permute.xlu0 %477
      %481 = vset.pattern.permute.xlu0 0
      %482 = vperm.xlu0 %481, %v464
      %v483 = vpop.permute.xlu0 %482
      %v489 = vunpack.c.l.b16 %v455
      %v490 = vunpack.c.l.b16 %v456
      %v491 = vunpack.c.l.b16 %v457
      %v492 = vunpack.c.l.b16 %v458
      %v493 = vpack.c.b16 %v490, %v489
      %v494 = vpack.c.b16 %v492, %v491
      %vm495 = vcmask 64512
      %v497 = vsel %vm495, %v493, 0
      %v500 = vsel %vm495, %v494, 0
      %vm502 = vcmask 1043456
      %v504 = vsel %vm502, %v459, 0
      %v507 = vsel %vm502, %v460, 0
      %509 = vmatprep.subr.bf16.mxu0 0
      %510 = vmatpush1.bf16.msra.mxu0 0
      %511 = vmatprep.subr.bf16.mxu0 0
      %512 = vmatpush1.bf16.msra.mxu0 0
      %513 = vmatprep.subr.bf16.mxu0 0
      %514 = vmatpush1.bf16.msra.mxu0 0
      %515 = vmatprep.subr.bf16.mxu0 0
      %516 = vmatpush1.bf16.msra.mxu0 0
      %517 = vmatprep.subr.bf16.mxu0 0
      %518 = vmatpush1.bf16.msra.mxu0 0
      %519 = vmatprep.subr.bf16.mxu0 0
      %520 = vmatpush1.bf16.msra.mxu0 0
      %521 = vmatprep.subr.bf16.mxu0 0
      %522 = vmatpush1.bf16.msra.mxu0 0
      %523 = vmatprep.subr.bf16.mxu0 %v507
      %524 = vmatpush1.bf16.msra.mxu0 %v504
      %525 = vmatprep.subr.bf16.mxu0 0
      %526 = vmatpush2.bf16.msra.mxu0 0
      %527 = vmatprep.subr.bf16.mxu0 0
      %528 = vmatpush2.bf16.msra.mxu0 0
      %529 = vmatprep.subr.bf16.mxu0 0
      %530 = vmatpush2.bf16.msra.mxu0 0
      %531 = vmatprep.subr.bf16.mxu0 0
      %532 = vmatpush2.bf16.msra.mxu0 0
      %533 = vmatprep.subr.bf16.mxu0 0
      %534 = vmatpush2.bf16.msra.mxu0 0
      %535 = vmatprep.subr.bf16.mxu0 0
      %536 = vmatpush2.bf16.msra.mxu0 0
      %537 = vmatprep.subr.bf16.mxu0 0
      %538 = vmatpush2.bf16.msra.mxu0 0
      %539 = vmatprep.subr.bf16.mxu0 0
      %540 = vmatpush2.bf16.msra.mxu0 0
      %541 = vmatprep.mubr.bf16.mxu0 0
      %542 = vmatmul.mubr.bf16.gmra.mxu0 %v497
      %v543 = vpop.f32.mrf.mxu0
      %v544 = vadd.f32 %v468, %v543
      %v545 = vpop.f32.mrf.mxu0
      %v546 = vadd.f32 %v468, %v545
      %v547 = vpop.f32.mrf.mxu0
      %v548 = vadd.f32 %v473, %v547
      %v549 = vpop.f32.mrf.mxu0
      %v550 = vadd.f32 %v473, %v549
      %551 = vmatprep.mubr.bf16.mxu0 0
      %552 = vmatmul.mubr.bf16.gmra.mxu0 %v500
      %v553 = vpop.f32.mrf.mxu0
      %v554 = vadd.f32 %v478, %v553
      %v555 = vpop.f32.mrf.mxu0
      %v556 = vadd.f32 %v478, %v555
      %v557 = vpop.f32.mrf.mxu0
      %v558 = vadd.f32 %v483, %v557
      %v559 = vpop.f32.mrf.mxu0
      %v560 = vadd.f32 %v483, %v559
      %561 = vdwg.mxu0
      %vm562 = vcmp.gt.f32.partialorder %v544, 0.0
      %vm563 = vcmp.gt.f32.partialorder %v546, 0.0
      %vm564 = vcmp.gt.f32.partialorder %v548, 0.0
      %vm565 = vcmp.gt.f32.partialorder %v550, 0.0
      %vm566 = vcmp.gt.f32.partialorder %v554, 0.0
      %vm567 = vcmp.gt.f32.partialorder %v556, 0.0
      %vm568 = vcmp.gt.f32.partialorder %v558, 0.0
      %vm569 = vcmp.gt.f32.partialorder %v560, 0.0
      %v570 = vmul.f32 %v544, 0.01
      %v571 = vmul.f32 %v546, 0.01
      %v572 = vmul.f32 %v548, 0.01
      %v573 = vmul.f32 %v550, 0.01
      %v574 = vmul.f32 %v554, 0.01
      %v575 = vmul.f32 %v556, 0.01
      %v576 = vmul.f32 %v558, 0.01
      %v577 = vmul.f32 %v560, 0.01
      %v578 = vsel %vm562, %v544, %v570
      %v579 = vsel %vm563, %v546, %v571
      %v580 = vsel %vm564, %v548, %v572
      %v581 = vsel %vm565, %v550, %v573
      %v582 = vsel %vm566, %v554, %v574
      %v583 = vsel %vm567, %v556, %v575
      %v584 = vsel %vm568, %v558, %v576
      %v585 = vsel %vm569, %v560, %v577
      %v586 = vld [vmem:[%s4] sm:$0xf]
      %v587 = vld [vmem:[%s4 + $0x4] sm:$0xf]
      %v588 = vld [vmem:[%s4 + $0x8] sm:$0xf]
      %v589 = vld [vmem:[%s4 + $0xc] sm:$0xf]
      %v590 = vpack.c.bf16 %v580, %v578
      %v591 = vpack.c.bf16 %v581, %v579
      %v592 = vpack.c.bf16 %v584, %v582
      %v593 = vpack.c.bf16 %v585, %v583
      %v594 = vld [vmem:[%s7 + $0x28] sm:$0xff]
      %v595 = vld [vmem:[%s7 + $0x30] sm:$0xff]
      %v596 = vld [vmem:[%s7 + $0x38] sm:$0xff]
      %v597 = vld [vmem:[%s7 + $0x40] sm:$0xff]
      %599 = vset.pattern.permute.xlu0 0
      %600 = vperm.xlu0 %599, %v594
      %v601 = vpop.permute.xlu0 %600
      %604 = vset.pattern.permute.xlu0 0
      %605 = vperm.xlu0 %604, %v595
      %v606 = vpop.permute.xlu0 %605
      %609 = vset.pattern.permute.xlu0 0
      %610 = vperm.xlu0 %609, %v596
      %v611 = vpop.permute.xlu0 %610
      %614 = vset.pattern.permute.xlu0 0
      %615 = vperm.xlu0 %614, %v597
      %v616 = vpop.permute.xlu0 %615
      %v622 = vunpack.c.l.b16 %v586
      %v623 = vunpack.c.l.b16 %v587
      %v624 = vunpack.c.l.b16 %v588
      %v625 = vunpack.c.l.b16 %v589
      %v626 = vpack.c.b16 %v623, %v622
      %v627 = vpack.c.b16 %v625, %v624
      %vm628 = vcmask 261120
      %v630 = vsel %vm628, %v626, 0
      %v633 = vsel %vm628, %v627, 0
      %635 = vmatprep.subr.bf16.mxu0 0
      %636 = vmatpush1.bf16.msra.mxu0 0
      %637 = vmatprep.subr.bf16.mxu0 0
      %638 = vmatpush1.bf16.msra.mxu0 0
      %639 = vmatprep.subr.bf16.mxu0 0
      %640 = vmatpush1.bf16.msra.mxu0 0
      %641 = vmatprep.subr.bf16.mxu0 0
      %642 = vmatpush1.bf16.msra.mxu0 0
      %643 = vmatprep.subr.bf16.mxu0 0
      %644 = vmatpush1.bf16.msra.mxu0 0
      %645 = vmatprep.subr.bf16.mxu0 0
      %646 = vmatpush1.bf16.msra.mxu0 0
      %647 = vmatprep.subr.bf16.mxu0 %v593
      %648 = vmatpush1.bf16.msra.mxu0 %v592
      %649 = vmatprep.subr.bf16.mxu0 %v591
      %650 = vmatpush1.bf16.msra.mxu0 %v590
      %651 = vmatprep.subr.bf16.mxu0 0
      %652 = vmatpush2.bf16.msra.mxu0 0
      %653 = vmatprep.subr.bf16.mxu0 0
      %654 = vmatpush2.bf16.msra.mxu0 0
      %655 = vmatprep.subr.bf16.mxu0 0
      %656 = vmatpush2.bf16.msra.mxu0 0
      %657 = vmatprep.subr.bf16.mxu0 0
      %658 = vmatpush2.bf16.msra.mxu0 0
      %659 = vmatprep.subr.bf16.mxu0 0
      %660 = vmatpush2.bf16.msra.mxu0 0
      %661 = vmatprep.subr.bf16.mxu0 0
      %662 = vmatpush2.bf16.msra.mxu0 0
      %663 = vmatprep.subr.bf16.mxu0 0
      %664 = vmatpush2.bf16.msra.mxu0 0
      %665 = vmatprep.subr.bf16.mxu0 0
      %666 = vmatpush2.bf16.msra.mxu0 0
      %667 = vmatprep.mubr.bf16.mxu0 0
      %668 = vmatmul.mubr.bf16.gmra.mxu0 %v630
      %v669 = vpop.f32.mrf.mxu0
      %v670 = vadd.f32 %v601, %v669
      %v671 = vpop.f32.mrf.mxu0
      %v672 = vadd.f32 %v601, %v671
      %v673 = vpop.f32.mrf.mxu0
      %v674 = vadd.f32 %v606, %v673
      %v675 = vpop.f32.mrf.mxu0
      %v676 = vadd.f32 %v606, %v675
      %677 = vmatprep.mubr.bf16.mxu0 0
      %678 = vmatmul.mubr.bf16.gmra.mxu0 %v633
      %v679 = vpop.f32.mrf.mxu0
      %v680 = vadd.f32 %v611, %v679
      %v681 = vpop.f32.mrf.mxu0
      %v682 = vadd.f32 %v611, %v681
      %v683 = vpop.f32.mrf.mxu0
      %v684 = vadd.f32 %v616, %v683
      %v685 = vpop.f32.mrf.mxu0
      %v686 = vadd.f32 %v616, %v685
      %687 = vdwg.mxu0
      %vm688 = vcmp.gt.f32.partialorder %v670, 0.0
      %vm689 = vcmp.gt.f32.partialorder %v672, 0.0
      %vm690 = vcmp.gt.f32.partialorder %v674, 0.0
      %vm691 = vcmp.gt.f32.partialorder %v676, 0.0
      %vm692 = vcmp.gt.f32.partialorder %v680, 0.0
      %vm693 = vcmp.gt.f32.partialorder %v682, 0.0
      %vm694 = vcmp.gt.f32.partialorder %v684, 0.0
      %vm695 = vcmp.gt.f32.partialorder %v686, 0.0
      %v696 = vmul.f32 %v670, 0.01
      %v697 = vmul.f32 %v672, 0.01
      %v698 = vmul.f32 %v674, 0.01
      %v699 = vmul.f32 %v676, 0.01
      %v700 = vmul.f32 %v680, 0.01
      %v701 = vmul.f32 %v682, 0.01
      %v702 = vmul.f32 %v684, 0.01
      %v703 = vmul.f32 %v686, 0.01
      %v704 = vsel %vm688, %v670, %v696
      %v705 = vsel %vm689, %v672, %v697
      %v706 = vsel %vm690, %v674, %v698
      %v707 = vsel %vm691, %v676, %v699
      %v708 = vsel %vm692, %v680, %v700
      %v709 = vsel %vm693, %v682, %v701
      %v710 = vsel %vm694, %v684, %v702
      %v711 = vsel %vm695, %v686, %v703
      %v712 = vpack.c.bf16 %v706, %v704
      %v713 = vpack.c.bf16 %v707, %v705
      %v714 = vpack.c.bf16 %v710, %v708
      %v715 = vpack.c.bf16 %v711, %v709
      %v716 = vld [vmem:[%s5] sm:$0xf]
      %v717 = vld [vmem:[%s7 + $0x48] sm:$0xff]
      %719 = vset.pattern.permute.xlu0 0
      %720 = vperm.xlu0 %719, %v717
      %v721 = vpop.permute.xlu0 %720
      %v724 = vsel %vm628, %v716, 0
      %726 = vmatprep.subr.bf16.mxu0 0
      %727 = vmatpush1.bf16.msra.mxu0 0
      %728 = vmatprep.subr.bf16.mxu0 0
      %729 = vmatpush1.bf16.msra.mxu0 0
      %730 = vmatprep.subr.bf16.mxu0 0
      %731 = vmatpush1.bf16.msra.mxu0 0
      %732 = vmatprep.subr.bf16.mxu0 0
      %733 = vmatpush1.bf16.msra.mxu0 0
      %734 = vmatprep.subr.bf16.mxu0 0
      %735 = vmatpush1.bf16.msra.mxu0 0
      %736 = vmatprep.subr.bf16.mxu0 0
      %737 = vmatpush1.bf16.msra.mxu0 0
      %738 = vmatprep.subr.bf16.mxu0 %v715
      %739 = vmatpush1.bf16.msra.mxu0 %v714
      %740 = vmatprep.subr.bf16.mxu0 %v713
      %741 = vmatpush1.bf16.msra.mxu0 %v712
      %742 = vmatprep.subr.bf16.mxu0 0
      %743 = vmatpush2.bf16.msra.mxu0 0
      %744 = vmatprep.subr.bf16.mxu0 0
      %745 = vmatpush2.bf16.msra.mxu0 0
      %746 = vmatprep.subr.bf16.mxu0 0
      %747 = vmatpush2.bf16.msra.mxu0 0
      %748 = vmatprep.subr.bf16.mxu0 0
      %749 = vmatpush2.bf16.msra.mxu0 0
      %750 = vmatprep.subr.bf16.mxu0 0
      %751 = vmatpush2.bf16.msra.mxu0 0
      %752 = vmatprep.subr.bf16.mxu0 0
      %753 = vmatpush2.bf16.msra.mxu0 0
      %754 = vmatprep.subr.bf16.mxu0 0
      %755 = vmatpush2.bf16.msra.mxu0 0
      %756 = vmatprep.subr.bf16.mxu0 0
      %757 = vmatpush2.bf16.msra.mxu0 0
      %758 = vmatprep.mubr.bf16.mxu0 0
      %759 = vmatmul.mubr.bf16.gmra.mxu0 %v724
      %v760 = vpop.f32.mrf.mxu0
      %v761 = vadd.f32 %v721, %v760
      %v762 = vpop.f32.mrf.mxu0
      %v763 = vadd.f32 %v721, %v762
      %v764 = vpop.f32.mrf.mxu0
      %v765 = vpop.f32.mrf.mxu0
      %766 = vdwg.mxu0
      %vm767 = vcmp.gt.f32.partialorder %v761, 0.0
      %vm768 = vcmp.gt.f32.partialorder %v763, 0.0
      %v769 = vmul.f32 %v761, 0.01
      %v770 = vmul.f32 %v763, 0.01
      %v771 = vsel %vm767, %v761, %v769
      %v772 = vsel %vm768, %v763, %v770
      %v773 = vld [vmem:[%s6] sm:$0xf]
      %v774 = vld [vmem:[%s7 + $0x50] sm:$0xff]
      %776 = vset.pattern.permute.xlu0 0
      %777 = vperm.xlu0 %776, %v774
      %v778 = vpop.permute.xlu0 %777
      %v781 = vsel %vm628, %v773, 0
      %783 = vmatprep.subr.bf16.mxu0 0
      %784 = vmatpush1.bf16.msra.mxu0 0
      %785 = vmatprep.subr.bf16.mxu0 0
      %786 = vmatpush1.bf16.msra.mxu0 0
      %787 = vmatprep.subr.bf16.mxu0 0
      %788 = vmatpush1.bf16.msra.mxu0 0
      %789 = vmatprep.subr.bf16.mxu0 0
      %790 = vmatpush1.bf16.msra.mxu0 0
      %791 = vmatprep.subr.bf16.mxu0 0
      %792 = vmatpush1.bf16.msra.mxu0 0
      %793 = vmatprep.subr.bf16.mxu0 0
      %794 = vmatpush1.bf16.msra.mxu0 0
      %795 = vmatprep.subr.bf16.mxu0 %v715
      %796 = vmatpush1.bf16.msra.mxu0 %v714
      %797 = vmatprep.subr.bf16.mxu0 %v713
      %798 = vmatpush1.bf16.msra.mxu0 %v712
      %799 = vmatprep.subr.bf16.mxu0 0
      %800 = vmatpush2.bf16.msra.mxu0 0
      %801 = vmatprep.subr.bf16.mxu0 0
      %802 = vmatpush2.bf16.msra.mxu0 0
      %803 = vmatprep.subr.bf16.mxu0 0
      %804 = vmatpush2.bf16.msra.mxu0 0
      %805 = vmatprep.subr.bf16.mxu0 0
      %806 = vmatpush2.bf16.msra.mxu0 0
      %807 = vmatprep.subr.bf16.mxu0 0
      %808 = vmatpush2.bf16.msra.mxu0 0
      %809 = vmatprep.subr.bf16.mxu0 0
      %810 = vmatpush2.bf16.msra.mxu0 0
      %811 = vmatprep.subr.bf16.mxu0 0
      %812 = vmatpush2.bf16.msra.mxu0 0
      %813 = vmatprep.subr.bf16.mxu0 0
      %814 = vmatpush2.bf16.msra.mxu0 0
      %815 = vmatprep.mubr.bf16.mxu0 0
      %816 = vmatmul.mubr.bf16.gmra.mxu0 %v781
      %v817 = vpop.f32.mrf.mxu0
      %v818 = vadd.f32 %v778, %v817
      %v819 = vpop.f32.mrf.mxu0
      %v820 = vadd.f32 %v778, %v819
      %v821 = vpop.f32.mrf.mxu0
      %v822 = vpop.f32.mrf.mxu0
      %823 = vdwg.mxu0
      %vm824 = vcmp.gt.f32.partialorder %v818, 0.0
      %vm825 = vcmp.gt.f32.partialorder %v820, 0.0
      %v826 = vmul.f32 %v818, 0.01
      %v827 = vmul.f32 %v820, 0.01
      %v828 = vsel %vm824, %v818, %v826
      %v829 = vsel %vm825, %v820, %v827
      %v830 = vtanh.pop %v828
      %v831 = vtanh.pop %v829
      %v832 = vtanh.pop %v453
      %v833 = vtanh.pop %v454
      %v834 = vpack.c.bf16 %v771, %v771
      %v835 = vpack.c.bf16 %v772, %v772
      %v836 = vld [vmem:[%s1] sm:$0xf]
      %v837 = vld [vmem:[%s1 + $0x4] sm:$0xf]
      %v838 = vld [vmem:[%s1 + $0x8] sm:$0xf]
      %v839 = vld [vmem:[%s1 + $0xc] sm:$0xf]
      %v840 = vld [vmem:[%s1 + $0x10] sm:$0xf]
      %v841 = vld [vmem:[%s1 + $0x14] sm:$0xf]
      %v842 = vld [vmem:[%s1 + $0x18] sm:$0xf]
      %v843 = vld [vmem:[%s1 + $0x1c] sm:$0xf]
      %v844 = vld [vmem:[%s1 + $0x20] sm:$0xf]
      %v845 = vld [vmem:[%s1 + $0x24] sm:$0xf]
      %v846 = vld [vmem:[%s1 + $0x28] sm:$0xf]
      %v847 = vld [vmem:[%s1 + $0x2c] sm:$0xf]
      %v848 = vld [vmem:[%s1 + $0x30] sm:$0xf]
      %v849 = vld [vmem:[%s1 + $0x34] sm:$0xf]
      %v850 = vld [vmem:[%s1 + $0x38] sm:$0xf]
      %v851 = vld [vmem:[%s1 + $0x3c] sm:$0xf]
      %v852 = vld [vmem:[%s1 + $0x40] sm:$0xf]
      %v853 = vld [vmem:[%s1 + $0x44] sm:$0xf]
      %v854 = vld [vmem:[%s1 + $0x48] sm:$0xf]
      %v855 = vld [vmem:[%s1 + $0x4c] sm:$0xf]
      %v856 = vld [vmem:[%s1 + $0x50] sm:$0xf]
      %v857 = vld [vmem:[%s1 + $0x54] sm:$0xf]
      %v858 = vld [vmem:[%s1 + $0x58] sm:$0xf]
      %v859 = vld [vmem:[%s1 + $0x5c] sm:$0xf]
      %v860 = vld [vmem:[%s1 + $0x60] sm:$0xf]
      %v861 = vld [vmem:[%s1 + $0x64] sm:$0xf]
      %v862 = vld [vmem:[%s1 + $0x68] sm:$0xf]
      %v863 = vld [vmem:[%s1 + $0x6c] sm:$0xf]
      %v864 = vld [vmem:[%s1 + $0x70] sm:$0xf]
      %v865 = vld [vmem:[%s1 + $0x74] sm:$0xf]
      %v866 = vld [vmem:[%s1 + $0x78] sm:$0xf]
      %v867 = vld [vmem:[%s1 + $0x7c] sm:$0xf]
      %v900 = vunpack.c.l.b16 %v836
      %v901 = vunpack.c.l.b16 %v837
      %v902 = vunpack.c.l.b16 %v838
      %v903 = vunpack.c.l.b16 %v839
      %v904 = vunpack.c.l.b16 %v840
      %v905 = vunpack.c.l.b16 %v841
      %v906 = vunpack.c.l.b16 %v842
      %v907 = vunpack.c.l.b16 %v843
      %v908 = vunpack.c.l.b16 %v844
      %v909 = vunpack.c.l.b16 %v845
      %v910 = vunpack.c.l.b16 %v846
      %v911 = vunpack.c.l.b16 %v847
      %v912 = vunpack.c.l.b16 %v848
      %v913 = vunpack.c.l.b16 %v849
      %v914 = vunpack.c.l.b16 %v850
      %v915 = vunpack.c.l.b16 %v851
      %v916 = vunpack.c.l.b16 %v852
      %v917 = vunpack.c.l.b16 %v853
      %v918 = vunpack.c.l.b16 %v854
      %v919 = vunpack.c.l.b16 %v855
      %v920 = vunpack.c.l.b16 %v856
      %v921 = vunpack.c.l.b16 %v857
      %v922 = vunpack.c.l.b16 %v858
      %v923 = vunpack.c.l.b16 %v859
      %v924 = vunpack.c.l.b16 %v860
      %v925 = vunpack.c.l.b16 %v861
      %v926 = vunpack.c.l.b16 %v862
      %v927 = vunpack.c.l.b16 %v863
      %v928 = vunpack.c.l.b16 %v864
      %v929 = vunpack.c.l.b16 %v865
      %v930 = vunpack.c.l.b16 %v866
      %v931 = vunpack.c.l.b16 %v867
      %v932 = vpack.c.b16 %v901, %v900
      %v933 = vpack.c.b16 %v903, %v902
      %v934 = vpack.c.b16 %v905, %v904
      %v935 = vpack.c.b16 %v907, %v906
      %v936 = vpack.c.b16 %v909, %v908
      %v937 = vpack.c.b16 %v911, %v910
      %v938 = vpack.c.b16 %v913, %v912
      %v939 = vpack.c.b16 %v915, %v914
      %v940 = vpack.c.b16 %v917, %v916
      %v941 = vpack.c.b16 %v919, %v918
      %v942 = vpack.c.b16 %v921, %v920
      %v943 = vpack.c.b16 %v923, %v922
      %v944 = vpack.c.b16 %v925, %v924
      %v945 = vpack.c.b16 %v927, %v926
      %v946 = vpack.c.b16 %v929, %v928
      %v947 = vpack.c.b16 %v931, %v930
      %964 = vmatprep.subr.bf16.mxu0 0
      %965 = vmatpush1.bf16.msra.mxu0 %v939
      %966 = vmatprep.subr.bf16.mxu0 0
      %967 = vmatpush1.bf16.msra.mxu0 %v938
      %968 = vmatprep.subr.bf16.mxu0 0
      %969 = vmatpush1.bf16.msra.mxu0 %v937
      %970 = vmatprep.subr.bf16.mxu0 0
      %971 = vmatpush1.bf16.msra.mxu0 %v936
      %972 = vmatprep.subr.bf16.mxu0 0
      %973 = vmatpush1.bf16.msra.mxu0 %v935
      %974 = vmatprep.subr.bf16.mxu0 0
      %975 = vmatpush1.bf16.msra.mxu0 %v934
      %976 = vmatprep.subr.bf16.mxu0 0
      %977 = vmatpush1.bf16.msra.mxu0 %v933
      %978 = vmatprep.subr.bf16.mxu0 0
      %979 = vmatpush1.bf16.msra.mxu0 %v932
      %980 = vmatprep.subr.bf16.mxu0 0
      %981 = vmatpush2.bf16.msra.mxu0 %v947
      %982 = vmatprep.subr.bf16.mxu0 0
      %983 = vmatpush2.bf16.msra.mxu0 %v946
      %984 = vmatprep.subr.bf16.mxu0 0
      %985 = vmatpush2.bf16.msra.mxu0 %v945
      %986 = vmatprep.subr.bf16.mxu0 0
      %987 = vmatpush2.bf16.msra.mxu0 %v944
      %988 = vmatprep.subr.bf16.mxu0 0
      %989 = vmatpush2.bf16.msra.mxu0 %v943
      %990 = vmatprep.subr.bf16.mxu0 0
      %991 = vmatpush2.bf16.msra.mxu0 %v942
      %992 = vmatprep.subr.bf16.mxu0 0
      %993 = vmatpush2.bf16.msra.mxu0 %v941
      %994 = vmatprep.subr.bf16.mxu0 0
      %995 = vmatpush2.bf16.msra.mxu0 %v940
      %996 = vmatprep.mubr.bf16.mxu0 %v835
      %997 = vmatmul.mubr.bf16.gmra.mxu0 %v834
      %v998 = vpop.f32.mrf.mxu0
      %v999 = vadd.f32 0.0, %v998
      %v1000 = vpop.f32.mrf.mxu0
      %v1001 = vpop.f32.mrf.mxu0
      %v1002 = vpop.f32.mrf.mxu0
      %1003 = vdwg.mxu0
      %vm1004 = vcmask 130048
      %1005 = vst.msk [vmem:[%s372] sm:$0xff] %vm1004, %v999
      %1006 = vst [vmem:[%s377] sm:$0xff] %v830
      %1007 = vst [vmem:[%s377 + $0x8] sm:$0xff] %v831
      %1008 = vst [vmem:[%s382] sm:$0xff] %v832
      %1009 = vst [vmem:[%s382 + $0x8] sm:$0xff] %v833
      %p1010 = scmp.lt.s32.totalorder %s22, 1
      %s1011 = scalar_select %p1010, %s22, 1
      %s1012 = smul.addr %s1011, 8
      %s1013 = scalar_lea.vmem %s8, %s1012
      %p1014 = scmp.lt.s32.totalorder %s22, 1
      %s1015 = scalar_select %p1014, %s22, 1
      %s1016 = smul.addr %s1015, 2
      %s1017 = smul.addr %s1016, 8
      %s1018 = scalar_lea.vmem %s9, %s1017
      %p1019 = scmp.lt.s32.totalorder %s22, 1
      %s1020 = scalar_select %p1019, %s22, 1
      %s1021 = smul.addr %s1020, 2
      %s1022 = smul.addr %s1021, 8
      %s1023 = scalar_lea.vmem %s10, %s1022
      // Predicated region
      $region53: #{static_dynamic_forward.1} parent=51 // pred_check
        %p1024 = pneg %p213
      $region54: #{static_dynamic_forward.1} parent=51 // pred_check_branch
        %1026 = sbr.rel (%p1024) target = $region56
      $region55: #{static_dynamic_forward.1} parent=51 // pred_region
        _
      $region56: #{static_dynamic_forward.1} parent=51 // pred_fallthru
        _
      // Predicated region
      $region57: #{static_dynamic_forward.1} parent=51 // pred_check
        %p1027 = pneg %p239
      $region58: #{static_dynamic_forward.1} parent=51 // pred_check_branch
        %1029 = sbr.rel (%p1027) target = $region60
      $region59: #{static_dynamic_forward.1} parent=51 // pred_region
        _
      $region60: #{static_dynamic_forward.1} parent=51 // pred_fallthru
        _
      // Predicated region
      $region61: #{static_dynamic_forward.1} parent=51 // pred_check
        %p1030 = pneg %p265
      $region62: #{static_dynamic_forward.1} parent=51 // pred_check_branch
        %1032 = sbr.rel (%p1030) target = $region64
      $region63: #{static_dynamic_forward.1} parent=51 // pred_region
        _
      $region64: #{static_dynamic_forward.1} parent=51 // pred_fallthru
        _
    $region52: #{static_dynamic_forward.1} parent=5 // pred_fallthru
      _
    %p1033 = scmp.le.s32.totalorder 2, %s17
    // Predicated region
    $region65: #{static_dynamic_forward.1} parent=5 // pred_check
      %p1034 = pneg %p1033
    $region66: #{static_dynamic_forward.1} parent=5 // pred_check_branch
      %1036 = sbr.rel (%p1034) target = $region68
    $region67: #{static_dynamic_forward.1} parent=5 // pred_region
      %s1037 = ssub.s32 %s17, 2
      // Predicated region
      $region69: #{static_dynamic_forward.1} parent=67 // pred_check
        %p1038 = pneg %p219
      $region70: #{static_dynamic_forward.1} parent=67 // pred_check_branch
        %1040 = sbr.rel (%p1038) target = $region72
      $region71: #{static_dynamic_forward.1} parent=67 // pred_region
        %p1041 = scmp.lt.s32.totalorder %s23, 1
        %s1042 = scalar_select %p1041, %s23, 1
        %s1043 = smul.addr %s1042, 8
        %s1044 = scalar_lea.vmem %s8, %s1043
      $region72: #{static_dynamic_forward.1} parent=67 // pred_fallthru
        _
      // Predicated region
      $region73: #{static_dynamic_forward.1} parent=67 // pred_check
        %p1045 = pneg %p245
      $region74: #{static_dynamic_forward.1} parent=67 // pred_check_branch
        %1047 = sbr.rel (%p1045) target = $region76
      $region75: #{static_dynamic_forward.1} parent=67 // pred_region
        %p1048 = scmp.lt.s32.totalorder %s23, 1
        %s1049 = scalar_select %p1048, %s23, 1
        %s1050 = smul.addr %s1049, 2
        %s1051 = smul.addr %s1050, 8
        %s1052 = scalar_lea.vmem %s9, %s1051
      $region76: #{static_dynamic_forward.1} parent=67 // pred_fallthru
        _
      // Predicated region
      $region77: #{static_dynamic_forward.1} parent=67 // pred_check
        %p1053 = pneg %p271
      $region78: #{static_dynamic_forward.1} parent=67 // pred_check_branch
        %1055 = sbr.rel (%p1053) target = $region80
      $region79: #{static_dynamic_forward.1} parent=67 // pred_region
        %p1056 = scmp.lt.s32.totalorder %s23, 1
        %s1057 = scalar_select %p1056, %s23, 1
        %s1058 = smul.addr %s1057, 2
        %s1059 = smul.addr %s1058, 8
        %s1060 = scalar_lea.vmem %s10, %s1059
      $region80: #{static_dynamic_forward.1} parent=67 // pred_fallthru
        _
    $region68: #{static_dynamic_forward.1} parent=5 // pred_fallthru
      _
  $region6: #{static_dynamic_forward.1} parent=0 // loop_footer
    %s21 = sadd.s32 1, %s17
  $region7: #{static_dynamic_forward.1} parent=0 // loop_footer_branch
    %16 = sbr.rel target = $region3
  $region8: #{static_dynamic_forward.1} parent=0 // loop_exit
    _

</llo_original>
